<compile_context>
chip_gen: v7x
topology: tpu7x:2x2x1
jax: 0.10.0
libtpu: 0.0.40
codegen_flags: <defaults>
</compile_context>

<pallas_src>
import functools

import numpy as np
import jax
import jax.numpy as jnp
from jax import lax
from jax.experimental import pallas as pl
from jax.experimental.pallas import tpu as pltpu


# -----------------------------------------------------------------------------
# Pallas kernel: one student-row tile per grid step
# -----------------------------------------------------------------------------
def _dino_loss_kernel(t_ref, s_ref, mask_ref, colsum_ref, out_ref,
                      *, inv_student_temp):
    # Student shifted logits for this row tile (f32 math regardless of input dtype).
    s = s_ref[...].astype(jnp.float32) * inv_student_temp
    s_max = jnp.max(s, axis=-1, keepdims=True)
    s_shift = s - s_max                                                  # (tile_s, D)
    # Log-partition per student row (log_softmax = s_shift - logz).
    logz = jnp.log(jnp.sum(jnp.exp(s_shift), axis=-1, keepdims=True))    # (tile_s, 1)

    # MXU matmul on bf16 operands with f32 accumulation; contract the feature
    # (lane) axis of both operands -> (B_t_pad, tile_s).  Independent of the
    # exp/log chain above, so the MXU pushes overlap the EUP work.
    dots = lax.dot_general(
        t_ref[...], s_shift.astype(jnp.bfloat16),
        dimension_numbers=(((1,), (1,)), ((), ())),
        preferred_element_type=jnp.float32)

    masked = mask_ref[...].astype(jnp.float32) * dots                    # (B_t_pad, tile_s)
    term1 = jnp.sum(jnp.sum(masked, axis=0, keepdims=True),
                    axis=1, keepdims=True)                               # (1, 1)
    term2 = jnp.sum(colsum_ref[...] * logz, axis=0, keepdims=True)       # (1, 1)
    partial = term1 - term2                                              # (1, 1)

    # Lane-dense per-tile output; epilogue reads lane 0 of each tile.
    out_ref[...] = jnp.broadcast_to(partial, (1, 128))


# -----------------------------------------------------------------------------
# Tile-size selection (generation-aware via VMEM capacity)
# -----------------------------------------------------------------------------
def _pick_tile_s(b_s, d, b_t_pad, in_itemsize):
    try:
        vmem_cap = int(pltpu.get_tpu_info().vmem_capacity_bytes)
    except Exception:
        vmem_cap = 64 * 1024 * 1024  # conservative default (v7x per-core VMEM)
    # fixed/per_row already include double buffering; keep a fixed headroom
    # for compiler-internal scratch instead of budgeting only a third.
    budget = int(vmem_cap * 0.75) - 8 * 1024 * 1024
    fixed = 2 * b_t_pad * d * 2                  # bf16 teacher softmax (2 buffers)
    per_row = (2 * d * in_itemsize               # student input (2 buffers)
               + 2 * d * 4 + d * 2               # f32 working copies + bf16 cast
               + 2 * b_t_pad * 2                 # bf16 mask (2 buffers)
               + b_t_pad * 4                     # f32 dots tile
               + 2 * 128 * 4)                    # colsum column (lane-padded)
    tile = (budget - fixed) // per_row if budget > fixed else 128
    cap = 1024 if vmem_cap <= 64 * 1024 * 1024 else 4096
    tile = int(max(128, min(tile, cap)))
    tile = (tile // 128) * 128
    tile = min(tile, max(128, ((b_s + 127) // 128) * 128))
    return tile, vmem_cap


# -----------------------------------------------------------------------------
# Host wrapper around the fused kernel
# -----------------------------------------------------------------------------
def dino_contrastive_loss(teacher_output, student_output, surrogate,
                          valid_idx_matrix, *, student_temp, teacher_temp,
                          tile_s=None):
    """Fused student-log-softmax / matmul / masked mean (teacher softmax hoisted)."""
    teacher_output = jnp.asarray(teacher_output)
    student_output = jnp.asarray(student_output)
    surrogate = jnp.asarray(surrogate)
    mask = jnp.asarray(valid_idx_matrix).astype(jnp.float32)

    b_t, d = teacher_output.shape
    b_s = student_output.shape[0]
    in_itemsize = jnp.dtype(student_output.dtype).itemsize

    # Mask count on the unpadded mask; zero-mask guard applied in the epilogue.
    valid_count = jnp.sum(mask)

    # Teacher softmax computed once in exact f32, streamed to the kernel as bf16.
    t_soft = jax.nn.softmax(
        (teacher_output.astype(jnp.float32) - surrogate.astype(jnp.float32))
        / teacher_temp, axis=-1).astype(jnp.bfloat16)

    b_t_pad = ((b_t + 7) // 8) * 8
    auto_tile, vmem_cap = _pick_tile_s(b_s, d, b_t_pad, in_itemsize)
    if tile_s is None:
        tile_s = auto_tile
    tile_s = max(128, (int(tile_s) // 128) * 128)

    num_tiles = -(-b_s // tile_s)
    b_s_pad = num_tiles * tile_s

    # Zero padding: padded student rows get a finite logZ but a zero mask
    # column-sum; padded teacher rows are zero in both t_soft and the mask,
    # so padding contributes exactly nothing (no inf/NaN).
    if b_s_pad != b_s:
        student_output = jnp.pad(student_output, ((0, b_s_pad - b_s), (0, 0)))
        mask = jnp.pad(mask, ((0, 0), (0, b_s_pad - b_s)))
    if b_t_pad != b_t:
        t_soft = jnp.pad(t_soft, ((0, b_t_pad - b_t), (0, 0)))
        mask = jnp.pad(mask, ((0, b_t_pad - b_t), (0, 0)))

    # Per-student-column mask sums (exact f32) for the logZ correction term.
    mask_colsum = jnp.sum(mask, axis=0).reshape(b_s_pad, 1)
    mask_bf16 = mask.astype(jnp.bfloat16)   # 0/1 values -> exact in bf16

    kernel = functools.partial(_dino_loss_kernel,
                               inv_student_temp=float(1.0 / student_temp))

    est = (2 * b_t_pad * d * 2
           + 2 * tile_s * d * in_itemsize
           + 3 * tile_s * d * 4 + tile_s * d * 2
           + 2 * b_t_pad * tile_s * 2 + b_t_pad * tile_s * 4
           + 2 * tile_s * 128 * 4 + 2 * 8 * 128 * 4)
    vmem_limit = int(min(max(2 * est, 32 * 1024 * 1024), int(vmem_cap * 0.9)))

    grid_spec = pltpu.PrefetchScalarGridSpec(
        num_scalar_prefetch=0,
        grid=(num_tiles,),
        in_specs=[
            # TODO(synk): pipeline_mode=pl.Buffered(1) on this constant-index
            # block would single-buffer it and halve its VMEM footprint.
            pl.BlockSpec((b_t_pad, d), lambda i: (0, 0)),        # teacher softmax (revisited)
            pl.BlockSpec((tile_s, d), lambda i: (i, 0)),         # student row tile
            pl.BlockSpec((b_t_pad, tile_s), lambda i: (0, i)),   # bf16 mask column tile
            pl.BlockSpec((tile_s, 1), lambda i: (i, 0)),         # mask column sums
        ],
        out_specs=pl.BlockSpec((1, 128), lambda i: (0, i)),      # per-tile partial (lane-dense)
    )

    partials = pl.pallas_call(
        kernel,
        out_shape=jax.ShapeDtypeStruct((1, num_tiles * 128), jnp.float32),
        grid_spec=grid_spec,
        compiler_params=pltpu.CompilerParams(
            dimension_semantics=("parallel",),   # independent per-tile outputs
            vmem_limit_bytes=vmem_limit),
    )(t_soft, student_output, mask_bf16, mask_colsum)

    total = jnp.sum(partials.reshape(num_tiles, 128)[:, 0])
    # Minus sign + masked-mean divide (with zero-mask guard) folded here.
    return -total / jnp.maximum(valid_count, 1.0)


# -----------------------------------------------------------------------------
# Module-equivalent wrapper (plain-JAX glue around the kernel)
# -----------------------------------------------------------------------------
class SupervisedContrastiveDINOLossJAX:
    def __init__(self, out_dim, ncrops, warmup_teacher_temp, teacher_temp,
                 warmup_teacher_temp_epochs, nepochs, batch_size_per_gpu,
                 student_temp=0.1, surrogate_momentum=0.9,
                 use_local_crops=True, random_crops_number=0):
        self.student_temp = student_temp
        self.surrogate_momentum = surrogate_momentum
        self.ncrops = ncrops
        self.out_dim = out_dim
        # buffer: surrogate initialized to zeros (as in the torch __init__)
        self.surrogate = jnp.zeros((1, out_dim), dtype=jnp.float32)
        self.teacher_temp_schedule = np.concatenate((
            np.linspace(warmup_teacher_temp, teacher_temp,
                        warmup_teacher_temp_epochs),
            np.ones(nepochs - warmup_teacher_temp_epochs) * teacher_temp))
        self.batch_size_per_gpu = batch_size_per_gpu
        self.bs_crops = batch_size_per_gpu * 1
        self.bs_local_crops = batch_size_per_gpu * (ncrops - 1)
        self.random_crops_number = random_crops_number
        self.bs_random_crops = batch_size_per_gpu * random_crops_number
        self.use_local_crops = use_local_crops

    def _valid_idx_matrix(self, labels, student_crops):
        labels = jnp.asarray(labels)
        ext_teacher = labels                                   # [B]
        ext_student = jnp.tile(labels, student_crops)          # [B * crops]
        n = (self.bs_crops + self.bs_local_crops + self.bs_random_crops
             if student_crops > 1 else self.bs_crops)
        if not self.use_local_crops:
            same = (ext_teacher[:, None] == ext_teacher[None, :]).astype(jnp.float32)
            if student_crops > 1:
                eye_rep = jnp.tile(jnp.eye(self.batch_size_per_gpu, dtype=jnp.float32),
                                   (1, self.ncrops - 1 + self.random_crops_number))
                same = jnp.concatenate([same, eye_rep], axis=1)
        else:
            same = (ext_teacher[:, None] == ext_student[None, :]).astype(jnp.float32)
        mask_global = jnp.concatenate(
            [jnp.eye(self.bs_crops, dtype=jnp.float32),
             jnp.zeros((self.bs_crops, n - self.bs_crops), dtype=jnp.float32)],
            axis=1)
        return same * (1.0 - mask_global)

    def forward(self, student_output, teacher_output, labels, epoch,
                student_patches=None, teacher_patches=None, tile_s=None):
        # student_patches / teacher_patches (multi_layer_loss / hook path) are
        # not part of the loss math translated here.
        student_crops = int(student_output.shape[0] // self.batch_size_per_gpu)
        valid_idx = self._valid_idx_matrix(labels, student_crops)
        temp = float(self.teacher_temp_schedule[epoch])
        loss = dino_contrastive_loss(
            teacher_output, student_output, self.surrogate, valid_idx,
            student_temp=self.student_temp, teacher_temp=temp, tile_s=tile_s)
        self.update_surrogate(teacher_output)
        return loss

    def update_surrogate(self, teacher_output):
        # TODO(synk): dist.all_reduce has no single-device Pallas equivalent;
        # world_size == 1 assumed here.
        batch_surrogate = jnp.sum(teacher_output, axis=0, keepdims=True)
        batch_surrogate = batch_surrogate / teacher_output.shape[0]
        self.surrogate = (self.surrogate * self.surrogate_momentum
                          + batch_surrogate * (1.0 - self.surrogate_momentum))


# -----------------------------------------------------------------------------
# Pure-JAX reference for a sanity check
# -----------------------------------------------------------------------------
def _ref_loss(student_output, teacher_output, surrogate, valid_idx,
              student_temp, teacher_temp):
    log_s = jax.nn.log_softmax(student_output / student_temp, axis=-1)
    t_soft = jax.nn.softmax((teacher_output - surrogate) / teacher_temp, axis=-1)
    loss_mat = -t_soft @ log_s.T
    return jnp.sum(loss_mat * valid_idx) / jnp.sum(valid_idx)


if __name__ == "__main__":
    # Small synthetic config, chosen so the kernel exercises multiple student
    # tiles plus row/column padding: out_dim=256, batch=12, ncrops=16,
    # tile_s=128 -> B_s = 192 padded to 256 = 2 grid steps; B_t = 12 -> 16.
    out_dim = 256
    batch_size_per_gpu = 12
    ncrops = 16
    num_classes = 4
    epoch = 3

    loss_mod = SupervisedContrastiveDINOLossJAX(
        out_dim=out_dim, ncrops=ncrops,
        warmup_teacher_temp=0.04, teacher_temp=0.07,
        warmup_teacher_temp_epochs=5, nepochs=20,
        batch_size_per_gpu=batch_size_per_gpu,
        student_temp=0.1, use_local_crops=True)

    key = jax.random.PRNGKey(0)
    k1, k2, k3 = jax.random.split(key, 3)
    teacher_output = jax.random.normal(
        k1, (batch_size_per_gpu, out_dim), dtype=jnp.float32)
    student_output = jax.random.normal(
        k2, (batch_size_per_gpu * ncrops, out_dim), dtype=jnp.float32)
    labels = jax.random.randint(k3, (batch_size_per_gpu,), 0, num_classes)

    loss = loss_mod.forward(student_output, teacher_output, labels, epoch,
                            tile_s=128)
    loss = jax.block_until_ready(loss)

    # Sanity check against the pure-JAX reference (tolerance accounts for the
    # bf16 MXU operands; accumulation stays f32).
    student_crops = student_output.shape[0] // batch_size_per_gpu
    valid_idx = loss_mod._valid_idx_matrix(labels, student_crops)
    ref = _ref_loss(student_output, teacher_output,
                    jnp.zeros((1, out_dim), jnp.float32), valid_idx,
                    0.1, float(loss_mod.teacher_temp_schedule[epoch]))
    np.testing.assert_allclose(np.asarray(loss), np.asarray(ref),
                               rtol=1e-2, atol=1e-3)

    print("KERNEL_OK")
</pallas_src>

<mosaic_0001>
module attributes {stable_mosaic.version = 11 : i64} {
  func.func @_dino_loss_kernel(%arg0: i32, %arg1: memref<16x256xbf16, #tpu.memory_space<vmem>>, %arg2: memref<128x256xf32, #tpu.memory_space<vmem>>, %arg3: memref<16x128xbf16, #tpu.memory_space<vmem>>, %arg4: memref<128x1xf32, #tpu.memory_space<vmem>>, %arg5: memref<1x128xf32, #tpu.memory_space<vmem>>) attributes {dimension_semantics = [#tpu.dimension_semantics<parallel>], iteration_bounds = array<i64: 2>, scalar_prefetch = 0 : i64, scratch_operands = 0 : i64, tpu.core_type = #tpu.core_type<tc>, window_params = [{pipeline_mode = #tpu.pipeline_mode<synchronous>, transform_indices = @transform_0, window_bounds = array<i64: 16, 256>}, {transform_indices = @transform_1, window_bounds = array<i64: 128, 256>}, {transform_indices = @transform_2, window_bounds = array<i64: 16, 128>}, {transform_indices = @transform_3, window_bounds = array<i64: 128, 1>}, {transform_indices = @transform_4, window_bounds = array<i64: 1, 128>}]} {
    %c0 = arith.constant 0 : index
    %c0_0 = arith.constant 0 : index
    %0 = vector.load %arg2[%c0, %c0_0] : memref<128x256xf32, #tpu.memory_space<vmem>>, vector<128x256xf32>
    %cst = arith.constant 1.000000e+01 : f32
    %1 = vector.broadcast %cst : f32 to vector<128x256xf32>
    %2 = arith.mulf %0, %1 : vector<128x256xf32>
    %cst_1 = arith.constant dense<0xFF800000> : vector<128xf32>
    %3 = vector.multi_reduction <maximumf>, %2, %cst_1 [1] : vector<128x256xf32> to vector<128xf32>
    %4 = vector.shape_cast %3 : vector<128xf32> to vector<128x1xf32>
    %5 = vector.broadcast %4 : vector<128x1xf32> to vector<128x256xf32>
    %6 = arith.subf %2, %5 : vector<128x256xf32>
    %7 = math.exp %6 : vector<128x256xf32>
    %cst_2 = arith.constant dense<0.000000e+00> : vector<128xf32>
    %8 = vector.multi_reduction <add>, %7, %cst_2 [1] : vector<128x256xf32> to vector<128xf32>
    %9 = vector.shape_cast %8 : vector<128xf32> to vector<128x1xf32>
    %10 = math.log %9 : vector<128x1xf32>
    %c0_3 = arith.constant 0 : index
    %c0_4 = arith.constant 0 : index
    %11 = vector.load %arg1[%c0_3, %c0_4] : memref<16x256xbf16, #tpu.memory_space<vmem>>, vector<16x256xbf16>
    %12 = arith.truncf %6 : vector<128x256xf32> to vector<128x256xbf16>
    %cst_5 = arith.constant dense<0.000000e+00> : vector<16x128xf32>
    %13 = tpu.matmul %11, %12, %cst_5 {dimension_numbers = #tpu.dot_dimension_numbers<[1], [1], [0], [0], [0, 0, 1, 0], [], []>} : vector<16x256xbf16>, vector<128x256xbf16>, vector<16x128xf32> -> vector<16x128xf32>
    %c0_6 = arith.constant 0 : index
    %c0_7 = arith.constant 0 : index
    %14 = vector.load %arg3[%c0_6, %c0_7] : memref<16x128xbf16, #tpu.memory_space<vmem>>, vector<16x128xbf16>
    %15 = arith.extf %14 : vector<16x128xbf16> to vector<16x128xf32>
    %16 = arith.mulf %15, %13 : vector<16x128xf32>
    %cst_8 = arith.constant dense<0.000000e+00> : vector<128xf32>
    %17 = vector.multi_reduction <add>, %16, %cst_8 [0] : vector<16x128xf32> to vector<128xf32>
    %18 = vector.shape_cast %17 : vector<128xf32> to vector<1x128xf32>
    %cst_9 = arith.constant dense<0.000000e+00> : vector<1xf32>
    %19 = vector.multi_reduction <add>, %18, %cst_9 [1] : vector<1x128xf32> to vector<1xf32>
    %20 = vector.shape_cast %19 : vector<1xf32> to vector<1x1xf32>
    %c0_10 = arith.constant 0 : index
    %c0_11 = arith.constant 0 : index
    %21 = vector.load %arg4[%c0_10, %c0_11] : memref<128x1xf32, #tpu.memory_space<vmem>>, vector<128x1xf32>
    %22 = arith.mulf %21, %10 : vector<128x1xf32>
    %cst_12 = arith.constant dense<0.000000e+00> : vector<1xf32>
    %23 = vector.multi_reduction <add>, %22, %cst_12 [0] : vector<128x1xf32> to vector<1xf32>
    %24 = vector.shape_cast %23 : vector<1xf32> to vector<1x1xf32>
    %25 = arith.subf %20, %24 : vector<1x1xf32>
    %26 = vector.shape_cast %25 : vector<1x1xf32> to vector<1x1xf32>
    %27 = vector.broadcast %26 : vector<1x1xf32> to vector<1x128xf32>
    %c0_13 = arith.constant 0 : index
    %c0_14 = arith.constant 0 : index
    %28 = vector.load %arg5[%c0_13, %c0_14] : memref<1x128xf32, #tpu.memory_space<vmem>>, vector<1x128xf32>
    tpu.vector_store %arg5[%c0_13, %c0_14], %27 {strides = array<i32>} : memref<1x128xf32, #tpu.memory_space<vmem>>, vector<1x128xf32>,
    return
  }
  func.func @transform_0(%arg0: i32) -> (i32, i32) {
    %c0_i32 = arith.constant 0 : i32
    %c0_i32_0 = arith.constant 0 : i32
    %c0_i32_1 = arith.constant 0 : i32
    return %c0_i32, %c0_i32_0 : i32, i32
  }
  func.func @transform_1(%arg0: i32) -> (i32, i32) {
    %c0_i32 = arith.constant 0 : i32
    %c0_i32_0 = arith.constant 0 : i32
    return %arg0, %c0_i32 : i32, i32
  }
  func.func @transform_2(%arg0: i32) -> (i32, i32) {
    %c0_i32 = arith.constant 0 : i32
    %c0_i32_0 = arith.constant 0 : i32
    return %c0_i32, %arg0 : i32, i32
  }
  func.func @transform_3(%arg0: i32) -> (i32, i32) {
    %c0_i32 = arith.constant 0 : i32
    %c0_i32_0 = arith.constant 0 : i32
    return %arg0, %c0_i32 : i32, i32
  }
  func.func @transform_4(%arg0: i32) -> (i32, i32) {
    %c0_i32 = arith.constant 0 : i32
    %c0_i32_0 = arith.constant 0 : i32
    return %c0_i32, %arg0 : i32, i32
  }
}

</mosaic_0001>

<llo_original>
// kernel: tpu_custom_call.1
$region0: #{tpu_custom_call.1}
  #allocation0 [shape = 'u32[]', space=smem, size = 0x4, offset = 0x4, fixed_abs, tag = 'smem constant byte address 0x4 - core index']
  #allocation1 [shape = 'u32[144,128]{1,0:T(1,128)}', space=vmem, size = 0x12000, scoped, tag = 'internal scratch']
  %s0 = inlined_call_operand.vmem [shape: bf16[16,256], index: 0, kind: input, shape index: {}]
  %s1 = inlined_call_operand.hbm [shape: f32[256,256], index: 1, kind: input, shape index: {}]
  %s2 = inlined_call_operand.vmem [shape: bf16[16,256], index: 2, kind: input, shape index: {}]
  %s3 = inlined_call_operand.vmem [shape: f32[256,1], index: 3, kind: input, shape index: {}]
  %s4 = inlined_call_operand.hbm [shape: f32[1,256], index: 4, kind: output, shape index: {}]
  %s5 = sld [smem:[#allocation0]]
  $region94: #{tpu_custom_call.1} parent=0
    _
  %s7 = ssub.s32 1, %s5
  %s8 = scalar_select 0, %s7, %s5
  $region1: #{tpu_custom_call.1} parent=0
    #allocation2 [shape = 'u8[262144]{0}', space=vmem, size = 0x40000, scoped, tag = 'input window, operand 1']
    #allocation3 [shape = 's32[2]{0}', space=sflag, size = 0x8, scoped, tag = 'scoped memory for tpu_custom_call.1']
    #allocation4 [shape = 's32[2]{0}', space=sflag, size = 0x8, scoped, tag = 'scoped memory for tpu_custom_call.1']
    #allocation5 [shape = 'u8[8192]{0}', space=vmem, size = 0x2000, scoped, tag = 'input window, operand 2']
    #allocation6 [shape = 'u8[1024]{0}', space=vmem, size = 0x400, scoped, tag = 'output window, operand 0']
    %9 = vsyncpa [#allocation3], 0
    %s10 = scalar_lea.sflag [#allocation3], 1
    %11 = vsyncpa %s10, 0
    %12 = vsyncpa [#allocation4], 0
    %s13 = scalar_lea.sflag [#allocation4], 1
    %14 = vsyncpa %s13, 0
    loop: start=0, step=1, limit=4
    $region2: #{tpu_custom_call.1} parent=1 // loop_pre_header
      _
    $region3: #{tpu_custom_call.1} parent=1 // loop_header
      %s16 = sphi 0, %s20
      %p17 = scmp.ge.s32.totalorder %s16, 4
      %s24 = sphi 0, %s24
      %s26 = sphi 0, %s24
      %s27 = sphi 0, %s26
      %s41 = sphi 0, %s27
      %s47 = sphi 0, %s49
      %s50 = sphi 0, %s47
      %s51 = sphi 0, %s50
      %s67 = sphi 0, %s51
      %s73 = sphi 0, %s75
      %s76 = sphi 0, %s73
      %s77 = sphi 0, %s76
      %s93 = sphi 0, %s77
      %s99 = sphi 0, %s101
      %s102 = sphi 0, %s99
      %s103 = sphi 0, %s102
      %s119 = sphi 0, %s103
      %s125 = sphi 0, %s127
      %s128 = sphi 0, %s125
      %s129 = sphi 0, %s128
      %s145 = sphi 0, %s129
    $region4: #{tpu_custom_call.1} parent=1 // loop_header_branch
      %19 = sbr.rel (%p17) target = $region8
    $region5: #{tpu_custom_call.1} parent=1 // loop_body
      %s21 = ssub.s32 %s16, 1
      %s22 = ssub.s32 %s16, 2
      %s23 = sadd.s32 %s16, 1
      %s25 = sadd.s32 %s24, 1
      %p28 = scmp.eq.s32.totalorder %s16, 1
      %p29 = scmp.ne.s32.totalorder %s24, %s26
      %p30 = scmp.eq.s32.totalorder %s16, 0
      %p31 = por %p29, %p30
      %p32 = scmp.ne.s32.totalorder %s24, %s26
      %p33 = scmp.eq.s32.totalorder %s21, 1
      %p34 = por %p32, %p33
      %p35 = scmp.ne.s32.totalorder %s26, %s27
      %p36 = scmp.eq.s32.totalorder %s21, 0
      %p37 = por %p35, %p36
      %p38 = scmp.ne.s32.totalorder %s26, %s27
      %p39 = scmp.eq.s32.totalorder %s22, 1
      %p40 = por %p38, %p39
      %p42 = scmp.ne.s32.totalorder %s27, %s41
      %p43 = scmp.eq.s32.totalorder %s22, 0
      %p44 = por %p42, %p43
      %s45 = ssub.s32 %s16, %s23
      %p46 = scmp.eq.s32.totalorder %s45, 0
      %s48 = sadd.s32 %s47, 1
      %s49 = scalar_select %p46, %s47, %s48
      %p52 = pneg %p46
      %p53 = scmp.eq.s32.totalorder %s16, 1
      %p54 = por %p52, %p53
      %p55 = scmp.ne.s32.totalorder %s47, %s50
      %p56 = scmp.eq.s32.totalorder %s16, 0
      %p57 = por %p55, %p56
      %p58 = scmp.ne.s32.totalorder %s47, %s50
      %p59 = scmp.eq.s32.totalorder %s21, 1
      %p60 = por %p58, %p59
      %p61 = scmp.ne.s32.totalorder %s50, %s51
      %p62 = scmp.eq.s32.totalorder %s21, 0
      %p63 = por %p61, %p62
      %p64 = scmp.ne.s32.totalorder %s50, %s51
      %p65 = scmp.eq.s32.totalorder %s22, 1
      %p66 = por %p64, %p65
      %p68 = scmp.ne.s32.totalorder %s51, %s67
      %p69 = scmp.eq.s32.totalorder %s22, 0
      %p70 = por %p68, %p69
      %s71 = ssub.s32 %s16, %s23
      %p72 = scmp.eq.s32.totalorder %s71, 0
      %s74 = sadd.s32 %s73, 1
      %s75 = scalar_select %p72, %s73, %s74
      %p78 = pneg %p72
      %p79 = scmp.eq.s32.totalorder %s16, 1
      %p80 = por %p78, %p79
      %p81 = scmp.ne.s32.totalorder %s73, %s76
      %p82 = scmp.eq.s32.totalorder %s16, 0
      %p83 = por %p81, %p82
      %p84 = scmp.ne.s32.totalorder %s73, %s76
      %p85 = scmp.eq.s32.totalorder %s21, 1
      %p86 = por %p84, %p85
      %p87 = scmp.ne.s32.totalorder %s76, %s77
      %p88 = scmp.eq.s32.totalorder %s21, 0
      %p89 = por %p87, %p88
      %p90 = scmp.ne.s32.totalorder %s76, %s77
      %p91 = scmp.eq.s32.totalorder %s22, 1
      %p92 = por %p90, %p91
      %p94 = scmp.ne.s32.totalorder %s77, %s93
      %p95 = scmp.eq.s32.totalorder %s22, 0
      %p96 = por %p94, %p95
      %s97 = ssub.s32 %s16, %s23
      %p98 = scmp.eq.s32.totalorder %s97, 0
      %s100 = sadd.s32 %s99, 1
      %s101 = scalar_select %p98, %s99, %s100
      %p104 = pneg %p98
      %p105 = scmp.eq.s32.totalorder %s16, 1
      %p106 = por %p104, %p105
      %p107 = scmp.ne.s32.totalorder %s99, %s102
      %p108 = scmp.eq.s32.totalorder %s16, 0
      %p109 = por %p107, %p108
      %p110 = scmp.ne.s32.totalorder %s99, %s102
      %p111 = scmp.eq.s32.totalorder %s21, 1
      %p112 = por %p110, %p111
      %p113 = scmp.ne.s32.totalorder %s102, %s103
      %p114 = scmp.eq.s32.totalorder %s21, 0
      %p115 = por %p113, %p114
      %p116 = scmp.ne.s32.totalorder %s102, %s103
      %p117 = scmp.eq.s32.totalorder %s22, 1
      %p118 = por %p116, %p117
      %p120 = scmp.ne.s32.totalorder %s103, %s119
      %p121 = scmp.eq.s32.totalorder %s22, 0
      %p122 = por %p120, %p121
      %s123 = ssub.s32 %s16, %s23
      %p124 = scmp.eq.s32.totalorder %s123, 0
      %s126 = sadd.s32 %s125, 1
      %s127 = scalar_select %p124, %s125, %s126
      %p130 = pneg %p124
      %p131 = scmp.eq.s32.totalorder %s16, 1
      %p132 = por %p130, %p131
      %p133 = scmp.ne.s32.totalorder %s125, %s128
      %p134 = scmp.eq.s32.totalorder %s16, 0
      %p135 = por %p133, %p134
      %p136 = scmp.ne.s32.totalorder %s125, %s128
      %p137 = scmp.eq.s32.totalorder %s21, 1
      %p138 = por %p136, %p137
      %p139 = scmp.ne.s32.totalorder %s128, %s129
      %p140 = scmp.eq.s32.totalorder %s21, 0
      %p141 = por %p139, %p140
      %p142 = scmp.ne.s32.totalorder %s128, %s129
      %p143 = scmp.eq.s32.totalorder %s22, 1
      %p144 = por %p142, %p143
      %p146 = scmp.ne.s32.totalorder %s129, %s145
      %p147 = scmp.eq.s32.totalorder %s22, 0
      %p148 = por %p146, %p147
      %p149 = scmp.le.s32.totalorder 1, %s16
      %p150 = scmp.lt.s32.totalorder %s16, 3
      %p151 = pnand %p149, %p150
      %p152 = pneg %p151
      // Predicated region
      $region9: #{tpu_custom_call.1} parent=5 // pred_check
        _
      $region10: #{tpu_custom_call.1} parent=5 // pred_check_branch
        %154 = sbr.rel (%p151) target = $region12
      $region11: #{tpu_custom_call.1} parent=5 // pred_region
        %s155 = ssub.s32 %s16, 1
        // Predicated region
        $region13: #{tpu_custom_call.1} parent=11 // pred_check
          %p156 = pneg %p37
        $region14: #{tpu_custom_call.1} parent=11 // pred_check_branch
          %158 = sbr.rel (%p156) target = $region16
        $region15: #{tpu_custom_call.1} parent=11 // pred_region
          _
        $region16: #{tpu_custom_call.1} parent=11 // pred_fallthru
          _
      $region12: #{tpu_custom_call.1} parent=5 // pred_fallthru
        _
      %p159 = scmp.lt.s32.totalorder %s16, 2
      // Predicated region
      $region17: #{tpu_custom_call.1} parent=5 // pred_check
        %p160 = pneg %p159
      $region18: #{tpu_custom_call.1} parent=5 // pred_check_branch
        %162 = sbr.rel (%p160) target = $region20
      $region19: #{tpu_custom_call.1} parent=5 // pred_region
        // Predicated region
        $region21: #{tpu_custom_call.1} parent=19 // pred_check
          %p163 = pneg %p57
        $region22: #{tpu_custom_call.1} parent=19 // pred_check_branch
          %165 = sbr.rel (%p163) target = $region24
        $region23: #{tpu_custom_call.1} parent=19 // pred_region
          %s166 = sand.u32 %s47, 1
          %s167 = scalar_lea.sflag [#allocation3], %s166
          %s168 = sand.u32 %s47, 1
          %s169 = smul.addr %s168, 256
          %s170 = scalar_lea.vmem [#allocation2], %s169
          %s171 = smul.u32 16, %s16
          %s173 = ssub.s32 4096, 4096
          %174 = vsyncadd %s167, %s173
          %s175 = smul.addr %s171, 2
          %s176 = smul.addr %s175, 128
          %s177 = scalar_lea.hbm %s1, %s176
          %s178 = sshll.u32 %s170, 4
          %s179 = int_to_ptr.vmem [resolvable:$true] %s178
          %184 = dma.hbm_to_vmem [thread:$0]  %s177, 4096, %s179, %s167, 256, 256, 16
        $region24: #{tpu_custom_call.1} parent=19 // pred_fallthru
          _
        // Predicated region
        $region25: #{tpu_custom_call.1} parent=19 // pred_check
          %p185 = pneg %p83
        $region26: #{tpu_custom_call.1} parent=19 // pred_check_branch
          %187 = sbr.rel (%p185) target = $region28
        $region27: #{tpu_custom_call.1} parent=19 // pred_region
          %s188 = sand.u32 %s73, 1
          %s189 = sand.u32 %s73, 1
          %s190 = smul.addr %s189, 8
          %s191 = scalar_lea.vmem [#allocation5], %s190
          %s192 = smul.addr %s16, 4
          %s193 = scalar_lea.vmem %s2, %s192
          // Predicated region
          $region29: #{tpu_custom_call.1} parent=27 // pred_check
            _
          $region30: #{tpu_custom_call.1} parent=27 // pred_check_branch
            %195 = sbr.rel (0) target = $region32
          $region31: #{tpu_custom_call.1} parent=27 // pred_region
            // Predicated region
            $region33: #{tpu_custom_call.1} parent=31 // pred_check
              _
            $region34: #{tpu_custom_call.1} parent=31 // pred_check_branch
              %197 = sbr.rel target = $region36
            $region35: #{tpu_custom_call.1} parent=31 // pred_region
              // Predicated region
              $region48: #{tpu_custom_call.1} parent=35 // pred_check
                _
              $region49: #{tpu_custom_call.1} parent=35 // pred_check_branch
                %214 = sbr.rel (0) target = $region51
              $region50: #{tpu_custom_call.1} parent=35 // pred_region
                loop: start=0, step=1, limit=1
                $region52: #{tpu_custom_call.1} parent=50 // loop_pre_header
                  _
                $region53: #{tpu_custom_call.1} parent=50 // loop_header
                  %s216 = sphi 0, %s220
                  %p217 = scmp.ge.s32.totalorder %s216, 1
                  %s221 = sphi %s193, %s193
                  %s222 = sphi %s191, %s191
                $region54: #{tpu_custom_call.1} parent=50 // loop_header_branch
                  %219 = sbr.rel (%p217) target = $region58
                $region55: #{tpu_custom_call.1} parent=50 // loop_body
                  _
                $region56: #{tpu_custom_call.1} parent=50 // loop_footer
                  %s220 = sadd.s32 1, %s216
                $region57: #{tpu_custom_call.1} parent=50 // loop_footer_branch
                  %215 = sbr.rel target = $region53
                $region58: #{tpu_custom_call.1} parent=50 // loop_exit
                  _
                loop: start=0, step=1, limit=1
                $region59: #{tpu_custom_call.1} parent=50 // loop_pre_header
                  _
                $region60: #{tpu_custom_call.1} parent=50 // loop_header
                  %s225 = sphi 0, %s229
                  %p226 = scmp.ge.s32.totalorder %s225, 1
                  %s230 = sphi %s193, %s193
                  %s231 = sphi %s191, %s191
                $region61: #{tpu_custom_call.1} parent=50 // loop_header_branch
                  %228 = sbr.rel (%p226) target = $region65
                $region62: #{tpu_custom_call.1} parent=50 // loop_body
                  %v232 = vld [vmem:[%s230] sm:$0xf]
                  %233 = vst [vmem:[%s231] sm:$0xf] %v232
                  %v234 = vld [vmem:[%s230 + $0x8] sm:$0xf]
                  %235 = vst [vmem:[%s231 + $0x4] sm:$0xf] %v234
                $region63: #{tpu_custom_call.1} parent=50 // loop_footer
                  %s229 = sadd.s32 1, %s225
                $region64: #{tpu_custom_call.1} parent=50 // loop_footer_branch
                  %224 = sbr.rel target = $region60
                $region65: #{tpu_custom_call.1} parent=50 // loop_exit
                  _
              $region51: #{tpu_custom_call.1} parent=35 // pred_fallthru
                _
            $region36: #{tpu_custom_call.1} parent=31 // pred_fallthru
              _
            // Predicated region
            $region37: #{tpu_custom_call.1} parent=31 // pred_check
              _
            $region38: #{tpu_custom_call.1} parent=31 // pred_check_branch
              %199 = sbr.rel (0) target = $region40
            $region39: #{tpu_custom_call.1} parent=31 // pred_region
              loop: start=0, step=1, limit=1
              $region41: #{tpu_custom_call.1} parent=39 // loop_pre_header
                _
              $region42: #{tpu_custom_call.1} parent=39 // loop_header
                %s202 = sphi 0, %s206
                %p203 = scmp.ge.s32.totalorder %s202, 1
                %s207 = sphi %s193, %s193
                %s208 = sphi %s191, %s191
              $region43: #{tpu_custom_call.1} parent=39 // loop_header_branch
                %205 = sbr.rel (%p203) target = $region47
              $region44: #{tpu_custom_call.1} parent=39 // loop_body
                %v209 = vld [vmem:[%s207] sm:$0xf]
                %210 = vst [vmem:[%s208] sm:$0xf] %v209
                %v211 = vld [vmem:[%s207 + $0x8] sm:$0xf]
                %212 = vst [vmem:[%s208 + $0x4] sm:$0xf] %v211
              $region45: #{tpu_custom_call.1} parent=39 // loop_footer
                %s206 = sadd.s32 1, %s202
              $region46: #{tpu_custom_call.1} parent=39 // loop_footer_branch
                %201 = sbr.rel target = $region42
              $region47: #{tpu_custom_call.1} parent=39 // loop_exit
                _
            $region40: #{tpu_custom_call.1} parent=31 // pred_fallthru
              _
          $region32: #{tpu_custom_call.1} parent=27 // pred_fallthru
            _
          %236 = vnop
        $region28: #{tpu_custom_call.1} parent=19 // pred_fallthru
          _
        // Predicated region
        $region66: #{tpu_custom_call.1} parent=19 // pred_check
          %p237 = pneg %p109
        $region67: #{tpu_custom_call.1} parent=19 // pred_check_branch
          %239 = sbr.rel (%p237) target = $region69
        $region68: #{tpu_custom_call.1} parent=19 // pred_region
          %s240 = smul.u32 16, %s16
          %p241 = scmp.lt.s32.totalorder %s240, 31
          %s242 = scalar_select %p241, %s240, 31
          %s243 = smul.addr %s242, 8
          %s244 = scalar_lea.vmem %s3, %s243
          %s245 = smul.u32 16, %s16
        $region69: #{tpu_custom_call.1} parent=19 // pred_fallthru
          _
      $region20: #{tpu_custom_call.1} parent=5 // pred_fallthru
        _
      %p246 = scmp.le.s32.totalorder 1, %s16
      %p247 = scmp.lt.s32.totalorder %s16, 3
      %p248 = pnand %p246, %p247
      %p249 = pneg %p248
      // Predicated region
      $region70: #{tpu_custom_call.1} parent=5 // pred_check
        _
      $region71: #{tpu_custom_call.1} parent=5 // pred_check_branch
        %251 = sbr.rel (%p248) target = $region73
      $region72: #{tpu_custom_call.1} parent=5 // pred_region
        %s252 = ssub.s32 %s16, 1
        %s253 = sand.u32 %s50, 1
        %s254 = scalar_lea.sflag [#allocation3], %s253
        %s255 = sand.u32 %s50, 1
        %s256 = smul.addr %s255, 256
        %s257 = scalar_lea.vmem [#allocation2], %s256
        // Predicated region
        $region74: #{tpu_custom_call.1} parent=72 // pred_check
          %p258 = pneg %p63
        $region75: #{tpu_custom_call.1} parent=72 // pred_check_branch
          %260 = sbr.rel (%p258) target = $region77
        $region76: #{tpu_custom_call.1} parent=72 // pred_region
          %261 = dma.done %s254, 4096
        $region77: #{tpu_custom_call.1} parent=72 // pred_fallthru
          _
        %s262 = sand.u32 %s76, 1
        %s263 = sand.u32 %s76, 1
        %s264 = smul.addr %s263, 8
        %s265 = scalar_lea.vmem [#allocation5], %s264
        // Predicated region
        $region78: #{tpu_custom_call.1} parent=72 // pred_check
          %p266 = pneg %p89
        $region79: #{tpu_custom_call.1} parent=72 // pred_check_branch
          %268 = sbr.rel (%p266) target = $region81
        $region80: #{tpu_custom_call.1} parent=72 // pred_region
          _
        $region81: #{tpu_custom_call.1} parent=72 // pred_fallthru
          _
        %p269 = pneg %p37
        %p270 = pneg %p34
        %s271 = sand.u32 %s50, 1
        %s272 = scalar_lea.sflag [#allocation3], %s271
        %s273 = sand.u32 %s50, 1
        %s274 = smul.addr %s273, 256
        %s275 = scalar_lea.vmem [#allocation2], %s274
        %p276 = pneg %p63
        %p277 = pneg %p60
        %s278 = sand.u32 %s76, 1
        %s279 = sand.u32 %s76, 1
        %s280 = smul.addr %s279, 8
        %s281 = scalar_lea.vmem [#allocation5], %s280
        %p282 = pneg %p89
        %p283 = pneg %p86
        %s284 = smul.u32 16, %s21
        %p285 = scmp.lt.s32.totalorder %s284, 31
        %s286 = scalar_select %p285, %s284, 31
        %s287 = smul.addr %s286, 8
        %s288 = scalar_lea.vmem %s3, %s287
        %p289 = pneg %p115
        %p290 = pneg %p112
        %p291 = pneg %p141
        %p292 = pneg %p138
        %s293 = sand.u32 %s128, 1
        %s294 = scalar_lea.sflag [#allocation4], %s293
        %s295 = sand.u32 %s128, 1
        %s296 = scalar_lea.vmem [#allocation6], %s295
        %s297 = smul.u32 16, %s21
        %s298 = smul.u32 16, %s21
        %p299 = scmp.lt.s32.totalorder %s298, 31
        %s300 = scalar_select %p299, %s298, 31
        %s301 = smul.addr %s300, 8
        %s302 = scalar_lea.vmem %s3, %s301
        %s303 = smul.u32 16, %s21
        %v305 = vld [vmem:[%s257] sm:$0xff]
        %v306 = vld [vmem:[%s257 + $0x8] sm:$0xff]
        %v307 = vld [vmem:[%s257 + $0x10] sm:$0xff]
        %v308 = vld [vmem:[%s257 + $0x18] sm:$0xff]
        %v309 = vld [vmem:[%s257 + $0x20] sm:$0xff]
        %v310 = vld [vmem:[%s257 + $0x28] sm:$0xff]
        %v311 = vld [vmem:[%s257 + $0x30] sm:$0xff]
        %v312 = vld [vmem:[%s257 + $0x38] sm:$0xff]
        %v313 = vld [vmem:[%s257 + $0x40] sm:$0xff]
        %v314 = vld [vmem:[%s257 + $0x48] sm:$0xff]
        %v315 = vld [vmem:[%s257 + $0x50] sm:$0xff]
        %v316 = vld [vmem:[%s257 + $0x58] sm:$0xff]
        %v317 = vld [vmem:[%s257 + $0x60] sm:$0xff]
        %v318 = vld [vmem:[%s257 + $0x68] sm:$0xff]
        %v319 = vld [vmem:[%s257 + $0x70] sm:$0xff]
        %v320 = vld [vmem:[%s257 + $0x78] sm:$0xff]
        %v321 = vld [vmem:[%s257 + $0x80] sm:$0xff]
        %v322 = vld [vmem:[%s257 + $0x88] sm:$0xff]
        %v323 = vld [vmem:[%s257 + $0x90] sm:$0xff]
        %v324 = vld [vmem:[%s257 + $0x98] sm:$0xff]
        %v325 = vld [vmem:[%s257 + $0xa0] sm:$0xff]
        %v326 = vld [vmem:[%s257 + $0xa8] sm:$0xff]
        %v327 = vld [vmem:[%s257 + $0xb0] sm:$0xff]
        %v328 = vld [vmem:[%s257 + $0xb8] sm:$0xff]
        %v329 = vld [vmem:[%s257 + $0xc0] sm:$0xff]
        %v330 = vld [vmem:[%s257 + $0xc8] sm:$0xff]
        %v331 = vld [vmem:[%s257 + $0xd0] sm:$0xff]
        %v332 = vld [vmem:[%s257 + $0xd8] sm:$0xff]
        %v333 = vld [vmem:[%s257 + $0xe0] sm:$0xff]
        %v334 = vld [vmem:[%s257 + $0xe8] sm:$0xff]
        %v335 = vld [vmem:[%s257 + $0xf0] sm:$0xff]
        %v336 = vld [vmem:[%s257 + $0xf8] sm:$0xff]
        %v337 = vmul.f32 %v305, 10.0
        %v338 = vmul.f32 %v306, 10.0
        %v339 = vmul.f32 %v307, 10.0
        %v340 = vmul.f32 %v308, 10.0
        %v341 = vmul.f32 %v309, 10.0
        %v342 = vmul.f32 %v310, 10.0
        %v343 = vmul.f32 %v311, 10.0
        %v344 = vmul.f32 %v312, 10.0
        %v345 = vmul.f32 %v313, 10.0
        %v346 = vmul.f32 %v314, 10.0
        %v347 = vmul.f32 %v315, 10.0
        %v348 = vmul.f32 %v316, 10.0
        %v349 = vmul.f32 %v317, 10.0
        %v350 = vmul.f32 %v318, 10.0
        %v351 = vmul.f32 %v319, 10.0
        %v352 = vmul.f32 %v320, 10.0
        %v353 = vmul.f32 %v321, 10.0
        %v354 = vmul.f32 %v322, 10.0
        %v355 = vmul.f32 %v323, 10.0
        %v356 = vmul.f32 %v324, 10.0
        %v357 = vmul.f32 %v325, 10.0
        %v358 = vmul.f32 %v326, 10.0
        %v359 = vmul.f32 %v327, 10.0
        %v360 = vmul.f32 %v328, 10.0
        %v361 = vmul.f32 %v329, 10.0
        %v362 = vmul.f32 %v330, 10.0
        %v363 = vmul.f32 %v331, 10.0
        %v364 = vmul.f32 %v332, 10.0
        %v365 = vmul.f32 %v333, 10.0
        %v366 = vmul.f32 %v334, 10.0
        %v367 = vmul.f32 %v335, 10.0
        %v368 = vmul.f32 %v336, 10.0
        %v369 = vmax.f32 %v337, %v338
        %370 = vmax.xlane.f32.xlu0 %v369
        %v371 = vpop.xlane.xlu0 %370
        %v372 = vmax.f32 %v339, %v340
        %373 = vmax.xlane.f32.xlu0 %v372
        %v374 = vpop.xlane.xlu0 %373
        %v375 = vmax.f32 %v341, %v342
        %376 = vmax.xlane.f32.xlu0 %v375
        %v377 = vpop.xlane.xlu0 %376
        %v378 = vmax.f32 %v343, %v344
        %379 = vmax.xlane.f32.xlu0 %v378
        %v380 = vpop.xlane.xlu0 %379
        %v381 = vmax.f32 %v345, %v346
        %382 = vmax.xlane.f32.xlu0 %v381
        %v383 = vpop.xlane.xlu0 %382
        %v384 = vmax.f32 %v347, %v348
        %385 = vmax.xlane.f32.xlu0 %v384
        %v386 = vpop.xlane.xlu0 %385
        %v387 = vmax.f32 %v349, %v350
        %388 = vmax.xlane.f32.xlu0 %v387
        %v389 = vpop.xlane.xlu0 %388
        %v390 = vmax.f32 %v351, %v352
        %391 = vmax.xlane.f32.xlu0 %v390
        %v392 = vpop.xlane.xlu0 %391
        %v393 = vmax.f32 %v353, %v354
        %394 = vmax.xlane.f32.xlu0 %v393
        %v395 = vpop.xlane.xlu0 %394
        %v396 = vmax.f32 %v355, %v356
        %397 = vmax.xlane.f32.xlu0 %v396
        %v398 = vpop.xlane.xlu0 %397
        %v399 = vmax.f32 %v357, %v358
        %400 = vmax.xlane.f32.xlu0 %v399
        %v401 = vpop.xlane.xlu0 %400
        %v402 = vmax.f32 %v359, %v360
        %403 = vmax.xlane.f32.xlu0 %v402
        %v404 = vpop.xlane.xlu0 %403
        %v405 = vmax.f32 %v361, %v362
        %406 = vmax.xlane.f32.xlu0 %v405
        %v407 = vpop.xlane.xlu0 %406
        %v408 = vmax.f32 %v363, %v364
        %409 = vmax.xlane.f32.xlu0 %v408
        %v410 = vpop.xlane.xlu0 %409
        %v411 = vmax.f32 %v365, %v366
        %412 = vmax.xlane.f32.xlu0 %v411
        %v413 = vpop.xlane.xlu0 %412
        %v414 = vmax.f32 %v367, %v368
        %415 = vmax.xlane.f32.xlu0 %v414
        %v416 = vpop.xlane.xlu0 %415
        %v417 = vsub.f32 %v337, %v371
        %v418 = vsub.f32 %v338, %v371
        %v419 = vsub.f32 %v339, %v374
        %v420 = vsub.f32 %v340, %v374
        %v421 = vsub.f32 %v341, %v377
        %v422 = vsub.f32 %v342, %v377
        %v423 = vsub.f32 %v343, %v380
        %v424 = vsub.f32 %v344, %v380
        %v425 = vsub.f32 %v345, %v383
        %v426 = vsub.f32 %v346, %v383
        %v427 = vsub.f32 %v347, %v386
        %v428 = vsub.f32 %v348, %v386
        %v429 = vsub.f32 %v349, %v389
        %v430 = vsub.f32 %v350, %v389
        %v431 = vsub.f32 %v351, %v392
        %v432 = vsub.f32 %v352, %v392
        %v433 = vsub.f32 %v353, %v395
        %v434 = vsub.f32 %v354, %v395
        %v435 = vsub.f32 %v355, %v398
        %v436 = vsub.f32 %v356, %v398
        %v437 = vsub.f32 %v357, %v401
        %v438 = vsub.f32 %v358, %v401
        %v439 = vsub.f32 %v359, %v404
        %v440 = vsub.f32 %v360, %v404
        %v441 = vsub.f32 %v361, %v407
        %v442 = vsub.f32 %v362, %v407
        %v443 = vsub.f32 %v363, %v410
        %v444 = vsub.f32 %v364, %v410
        %v445 = vsub.f32 %v365, %v413
        %v446 = vsub.f32 %v366, %v413
        %v447 = vsub.f32 %v367, %v416
        %v448 = vsub.f32 %v368, %v416
        %v449 = vmul.f32 %v417, 1.442695
        %v450 = vpow.pop %v449
        %v451 = vmul.f32 %v418, 1.442695
        %v452 = vpow.pop %v451
        %v453 = vmul.f32 %v419, 1.442695
        %v454 = vpow.pop %v453
        %v455 = vmul.f32 %v420, 1.442695
        %v456 = vpow.pop %v455
        %v457 = vmul.f32 %v421, 1.442695
        %v458 = vpow.pop %v457
        %v459 = vmul.f32 %v422, 1.442695
        %v460 = vpow.pop %v459
        %v461 = vmul.f32 %v423, 1.442695
        %v462 = vpow.pop %v461
        %v463 = vmul.f32 %v424, 1.442695
        %v464 = vpow.pop %v463
        %v465 = vmul.f32 %v425, 1.442695
        %v466 = vpow.pop %v465
        %v467 = vmul.f32 %v426, 1.442695
        %v468 = vpow.pop %v467
        %v469 = vmul.f32 %v427, 1.442695
        %v470 = vpow.pop %v469
        %v471 = vmul.f32 %v428, 1.442695
        %v472 = vpow.pop %v471
        %v473 = vmul.f32 %v429, 1.442695
        %v474 = vpow.pop %v473
        %v475 = vmul.f32 %v430, 1.442695
        %v476 = vpow.pop %v475
        %v477 = vmul.f32 %v431, 1.442695
        %v478 = vpow.pop %v477
        %v479 = vmul.f32 %v432, 1.442695
        %v480 = vpow.pop %v479
        %v481 = vmul.f32 %v433, 1.442695
        %v482 = vpow.pop %v481
        %v483 = vmul.f32 %v434, 1.442695
        %v484 = vpow.pop %v483
        %v485 = vmul.f32 %v435, 1.442695
        %v486 = vpow.pop %v485
        %v487 = vmul.f32 %v436, 1.442695
        %v488 = vpow.pop %v487
        %v489 = vmul.f32 %v437, 1.442695
        %v490 = vpow.pop %v489
        %v491 = vmul.f32 %v438, 1.442695
        %v492 = vpow.pop %v491
        %v493 = vmul.f32 %v439, 1.442695
        %v494 = vpow.pop %v493
        %v495 = vmul.f32 %v440, 1.442695
        %v496 = vpow.pop %v495
        %v497 = vmul.f32 %v441, 1.442695
        %v498 = vpow.pop %v497
        %v499 = vmul.f32 %v442, 1.442695
        %v500 = vpow.pop %v499
        %v501 = vmul.f32 %v443, 1.442695
        %v502 = vpow.pop %v501
        %v503 = vmul.f32 %v444, 1.442695
        %v504 = vpow.pop %v503
        %v505 = vmul.f32 %v445, 1.442695
        %v506 = vpow.pop %v505
        %v507 = vmul.f32 %v446, 1.442695
        %v508 = vpow.pop %v507
        %v509 = vmul.f32 %v447, 1.442695
        %v510 = vpow.pop %v509
        %v511 = vmul.f32 %v448, 1.442695
        %v512 = vpow.pop %v511
        %v513 = vadd.f32 %v450, %v452
        %514 = vadd.xlane.f32.xlu0 %v513
        %v515 = vpop.xlane.xlu0 %514
        %v516 = vadd.f32 %v454, %v456
        %517 = vadd.xlane.f32.xlu0 %v516
        %v518 = vpop.xlane.xlu0 %517
        %v519 = vadd.f32 %v458, %v460
        %520 = vadd.xlane.f32.xlu0 %v519
        %v521 = vpop.xlane.xlu0 %520
        %v522 = vadd.f32 %v462, %v464
        %523 = vadd.xlane.f32.xlu0 %v522
        %v524 = vpop.xlane.xlu0 %523
        %v525 = vadd.f32 %v466, %v468
        %526 = vadd.xlane.f32.xlu0 %v525
        %v527 = vpop.xlane.xlu0 %526
        %v528 = vadd.f32 %v470, %v472
        %529 = vadd.xlane.f32.xlu0 %v528
        %v530 = vpop.xlane.xlu0 %529
        %v531 = vadd.f32 %v474, %v476
        %532 = vadd.xlane.f32.xlu0 %v531
        %v533 = vpop.xlane.xlu0 %532
        %v534 = vadd.f32 %v478, %v480
        %535 = vadd.xlane.f32.xlu0 %v534
        %v536 = vpop.xlane.xlu0 %535
        %v537 = vadd.f32 %v482, %v484
        %538 = vadd.xlane.f32.xlu0 %v537
        %v539 = vpop.xlane.xlu0 %538
        %v540 = vadd.f32 %v486, %v488
        %541 = vadd.xlane.f32.xlu0 %v540
        %v542 = vpop.xlane.xlu0 %541
        %v543 = vadd.f32 %v490, %v492
        %544 = vadd.xlane.f32.xlu0 %v543
        %v545 = vpop.xlane.xlu0 %544
        %v546 = vadd.f32 %v494, %v496
        %547 = vadd.xlane.f32.xlu0 %v546
        %v548 = vpop.xlane.xlu0 %547
        %v549 = vadd.f32 %v498, %v500
        %550 = vadd.xlane.f32.xlu0 %v549
        %v551 = vpop.xlane.xlu0 %550
        %v552 = vadd.f32 %v502, %v504
        %553 = vadd.xlane.f32.xlu0 %v552
        %v554 = vpop.xlane.xlu0 %553
        %v555 = vadd.f32 %v506, %v508
        %556 = vadd.xlane.f32.xlu0 %v555
        %v557 = vpop.xlane.xlu0 %556
        %v558 = vadd.f32 %v510, %v512
        %559 = vadd.xlane.f32.xlu0 %v558
        %v560 = vpop.xlane.xlu0 %559
        %v561 = vlog2.pop %v515
        %v562 = vmul.f32 %v561, 0.6931472
        %v563 = vlog2.pop %v518
        %v564 = vmul.f32 %v563, 0.6931472
        %v565 = vlog2.pop %v521
        %v566 = vmul.f32 %v565, 0.6931472
        %v567 = vlog2.pop %v524
        %v568 = vmul.f32 %v567, 0.6931472
        %v569 = vlog2.pop %v527
        %v570 = vmul.f32 %v569, 0.6931472
        %v571 = vlog2.pop %v530
        %v572 = vmul.f32 %v571, 0.6931472
        %v573 = vlog2.pop %v533
        %v574 = vmul.f32 %v573, 0.6931472
        %v575 = vlog2.pop %v536
        %v576 = vmul.f32 %v575, 0.6931472
        %v577 = vlog2.pop %v539
        %v578 = vmul.f32 %v577, 0.6931472
        %v579 = vlog2.pop %v542
        %v580 = vmul.f32 %v579, 0.6931472
        %v581 = vlog2.pop %v545
        %v582 = vmul.f32 %v581, 0.6931472
        %v583 = vlog2.pop %v548
        %v584 = vmul.f32 %v583, 0.6931472
        %v585 = vlog2.pop %v551
        %v586 = vmul.f32 %v585, 0.6931472
        %v587 = vlog2.pop %v554
        %v588 = vmul.f32 %v587, 0.6931472
        %v589 = vlog2.pop %v557
        %v590 = vmul.f32 %v589, 0.6931472
        %v591 = vlog2.pop %v560
        %v592 = vmul.f32 %v591, 0.6931472
        %v593 = vld [vmem:[%s0] sm:$0xff]
        %v594 = vld [vmem:[%s0 + $0x8] sm:$0xff]
        %v595 = vpack.c.bf16 %v419, %v417
        %v596 = vpack.c.bf16 %v420, %v418
        %v597 = vpack.c.bf16 %v423, %v421
        %v598 = vpack.c.bf16 %v424, %v422
        %v599 = vpack.c.bf16 %v427, %v425
        %v600 = vpack.c.bf16 %v428, %v426
        %v601 = vpack.c.bf16 %v431, %v429
        %v602 = vpack.c.bf16 %v432, %v430
        %v603 = vpack.c.bf16 %v435, %v433
        %v604 = vpack.c.bf16 %v436, %v434
        %v605 = vpack.c.bf16 %v439, %v437
        %v606 = vpack.c.bf16 %v440, %v438
        %v607 = vpack.c.bf16 %v443, %v441
        %v608 = vpack.c.bf16 %v444, %v442
        %v609 = vpack.c.bf16 %v447, %v445
        %v610 = vpack.c.bf16 %v448, %v446
        %v613 = vunpack.c.l.b16 %v593
        %v614 = vunpack.c.h.b16 %v593
        %v615 = vunpack.c.l.b16 %v594
        %v616 = vunpack.c.h.b16 %v594
        %v617 = vpack.c.b16 %v615, %v613
        %v618 = vpack.c.b16 %v616, %v614
        %621 = vmatprep.subr.bf16.mxu0 %v596
        %622 = vmatpush1.bf16.xpose.msra.mxu0 %v595
        %623 = vmatprep.subr.bf16.mxu0 %v598
        %624 = vmatpush1.bf16.xpose.msra.mxu0 %v597
        %625 = vmatprep.subr.bf16.mxu0 %v600
        %626 = vmatpush1.bf16.xpose.msra.mxu0 %v599
        %627 = vmatprep.subr.bf16.mxu0 %v602
        %628 = vmatpush1.bf16.xpose.msra.mxu0 %v601
        %629 = vmatprep.subr.bf16.mxu0 %v604
        %630 = vmatpush1.bf16.xpose.msra.mxu0 %v603
        %631 = vmatprep.subr.bf16.mxu0 %v606
        %632 = vmatpush1.bf16.xpose.msra.mxu0 %v605
        %633 = vmatprep.subr.bf16.mxu0 %v608
        %634 = vmatpush1.bf16.xpose.msra.mxu0 %v607
        %635 = vmatprep.subr.bf16.mxu0 %v610
        %636 = vmatpush1.bf16.xpose.msra.mxu0 %v609
        %637 = vmatprep.subr.bf16.mxu0 0
        %638 = vmatpush1.bf16.xpose.msra.mxu0 0
        %639 = vmatprep.subr.bf16.mxu0 0
        %640 = vmatpush1.bf16.xpose.msra.mxu0 0
        %641 = vmatprep.subr.bf16.mxu0 0
        %642 = vmatpush1.bf16.xpose.msra.mxu0 0
        %643 = vmatprep.subr.bf16.mxu0 0
        %644 = vmatpush1.bf16.xpose.msra.mxu0 0
        %645 = vmatprep.subr.bf16.mxu0 0
        %646 = vmatpush1.bf16.xpose.msra.mxu0 0
        %647 = vmatprep.subr.bf16.mxu0 0
        %648 = vmatpush1.bf16.xpose.msra.mxu0 0
        %649 = vmatprep.subr.bf16.mxu0 0
        %650 = vmatpush1.bf16.xpose.msra.mxu0 0
        %651 = vmatprep.subr.bf16.mxu0 0
        %652 = vmatpush1.bf16.xpose.msra.mxu0 0
        %653 = vmatprep.mubr.bf16.mxu0 %v618
        %654 = vmatmul.mubr.bf16.gmra.mrb[0].mxu0 %v617
        %v655 = vpop.f32.mrb[0].mxu0
        %v656 = vadd.f32 0.0, %v655
        %v657 = vpop.f32.mrb[0].mxu0
        %v658 = vpop.f32.mrb[0].mxu0
        %v659 = vadd.f32 0.0, %v658
        %v660 = vpop.f32.mrb[0].mxu0
        %661 = vdwg.mxu0
        %v662 = vld [vmem:[%s265] sm:$0xf]
        %v663 = vld [vmem:[%s265 + $0x4] sm:$0xf]
        %v664 = vunpack.c.l.bf16 %v662
        %v665 = vunpack.c.l.bf16 %v663
        %v666 = vmul.f32 %v664, %v656
        %v667 = vmul.f32 %v665, %v659
        %v668 = vadd.f32 %v666, %v667
        %v669 = vrot.slane %v668, 4
        %v670 = vadd.f32 %v668, %v669
        %v671 = vrot.slane %v670, 2
        %v672 = vadd.f32 %v670, %v671
        %v673 = vrot.slane %v672, 1
        %v674 = vadd.f32 %v672, %v673
        %675 = vadd.xlane.f32.xlu0 %v674
        %v676 = vpop.xlane.xlu0 %675
        %v677 = vld [vmem:[%s302] sm:$0xff]
        %v678 = vld [vmem:[%s302 + $0x8] sm:$0xff]
        %v679 = vld [vmem:[%s302 + $0x10] sm:$0xff]
        %v680 = vld [vmem:[%s302 + $0x18] sm:$0xff]
        %v681 = vld [vmem:[%s302 + $0x20] sm:$0xff]
        %v682 = vld [vmem:[%s302 + $0x28] sm:$0xff]
        %v683 = vld [vmem:[%s302 + $0x30] sm:$0xff]
        %v684 = vld [vmem:[%s302 + $0x38] sm:$0xff]
        %v685 = vld [vmem:[%s302 + $0x40] sm:$0xff]
        %v686 = vld [vmem:[%s302 + $0x48] sm:$0xff]
        %v687 = vld [vmem:[%s302 + $0x50] sm:$0xff]
        %v688 = vld [vmem:[%s302 + $0x58] sm:$0xff]
        %v689 = vld [vmem:[%s302 + $0x60] sm:$0xff]
        %v690 = vld [vmem:[%s302 + $0x68] sm:$0xff]
        %v691 = vld [vmem:[%s302 + $0x70] sm:$0xff]
        %v692 = vld [vmem:[%s302 + $0x78] sm:$0xff]
        %v693 = vmul.f32 %v677, %v562
        %v694 = vmul.f32 %v678, %v564
        %v695 = vmul.f32 %v679, %v566
        %v696 = vmul.f32 %v680, %v568
        %v697 = vmul.f32 %v681, %v570
        %v698 = vmul.f32 %v682, %v572
        %v699 = vmul.f32 %v683, %v574
        %v700 = vmul.f32 %v684, %v576
        %v701 = vmul.f32 %v685, %v578
        %v702 = vmul.f32 %v686, %v580
        %v703 = vmul.f32 %v687, %v582
        %v704 = vmul.f32 %v688, %v584
        %v705 = vmul.f32 %v689, %v586
        %v706 = vmul.f32 %v690, %v588
        %v707 = vmul.f32 %v691, %v590
        %v708 = vmul.f32 %v692, %v592
        %vm709 = vcmask 7168
        %v710 = vsel %vm709, %v693, 0.0
        %v711 = vsel %vm709, %v694, 0.0
        %v712 = vadd.f32 %v710, %v711
        %v713 = vsel %vm709, %v695, 0.0
        %v714 = vadd.f32 %v712, %v713
        %v715 = vsel %vm709, %v696, 0.0
        %v716 = vadd.f32 %v714, %v715
        %v717 = vsel %vm709, %v697, 0.0
        %v718 = vadd.f32 %v716, %v717
        %v719 = vsel %vm709, %v698, 0.0
        %v720 = vadd.f32 %v718, %v719
        %v721 = vsel %vm709, %v699, 0.0
        %v722 = vadd.f32 %v720, %v721
        %v723 = vsel %vm709, %v700, 0.0
        %v724 = vadd.f32 %v722, %v723
        %v725 = vsel %vm709, %v701, 0.0
        %v726 = vadd.f32 %v724, %v725
        %v727 = vsel %vm709, %v702, 0.0
        %v728 = vadd.f32 %v726, %v727
        %v729 = vsel %vm709, %v703, 0.0
        %v730 = vadd.f32 %v728, %v729
        %v731 = vsel %vm709, %v704, 0.0
        %v732 = vadd.f32 %v730, %v731
        %v733 = vsel %vm709, %v705, 0.0
        %v734 = vadd.f32 %v732, %v733
        %v735 = vsel %vm709, %v706, 0.0
        %v736 = vadd.f32 %v734, %v735
        %v737 = vsel %vm709, %v707, 0.0
        %v738 = vadd.f32 %v736, %v737
        %v739 = vsel %vm709, %v708, 0.0
        %v740 = vadd.f32 %v738, %v739
        %v741 = vrot.slane %v740, 4
        %v742 = vadd.f32 %v740, %v741
        %v743 = vrot.slane %v742, 2
        %v744 = vadd.f32 %v742, %v743
        %v745 = vrot.slane %v744, 1
        %v746 = vadd.f32 %v744, %v745
        %v747 = vsub.f32 %v676, %v746
        %749 = vset.pattern.permute.xlu0 0
        %750 = vperm.xlu0 %749, %v747
        %v751 = vpop.permute.xlu0 %750
        %753 = vst [vmem:[%s296] sm:$0x1] %v751
        %s754 = sand.u32 %s128, 1
        %s755 = scalar_lea.sflag [#allocation4], %s754
        %s756 = sand.u32 %s128, 1
        %s757 = scalar_lea.vmem [#allocation6], %s756
        // Predicated region
        $region82: #{tpu_custom_call.1} parent=72 // pred_check
          %p758 = pneg %p138
        $region83: #{tpu_custom_call.1} parent=72 // pred_check_branch
          %760 = sbr.rel (%p758) target = $region85
        $region84: #{tpu_custom_call.1} parent=72 // pred_region
          %s762 = ssub.s32 16, 16
          %763 = vsyncadd %s755, %s762
          %s764 = smul.addr %s21, 16
          %s765 = scalar_lea.hbm %s4, %s764
          %s767 = sshll.u32 %s757, 4
          %s768 = int_to_ptr.vmem [resolvable:$true] %s767
          %770 = dma.vmem_to_hbm [thread:$0]  %s768, 16, %s765, %s755
        $region85: #{tpu_custom_call.1} parent=72 // pred_fallthru
          _
      $region73: #{tpu_custom_call.1} parent=5 // pred_fallthru
        _
      %p771 = scmp.le.s32.totalorder 2, %s16
      // Predicated region
      $region86: #{tpu_custom_call.1} parent=5 // pred_check
        %p772 = pneg %p771
      $region87: #{tpu_custom_call.1} parent=5 // pred_check_branch
        %774 = sbr.rel (%p772) target = $region89
      $region88: #{tpu_custom_call.1} parent=5 // pred_region
        %s775 = ssub.s32 %s16, 2
        // Predicated region
        $region90: #{tpu_custom_call.1} parent=88 // pred_check
          %p776 = pneg %p144
        $region91: #{tpu_custom_call.1} parent=88 // pred_check_branch
          %778 = sbr.rel (%p776) target = $region93
        $region92: #{tpu_custom_call.1} parent=88 // pred_region
          %s779 = sand.u32 %s129, 1
          %s780 = scalar_lea.sflag [#allocation4], %s779
          %s781 = sand.u32 %s129, 1
          %s782 = scalar_lea.vmem [#allocation6], %s781
          %783 = dma.done %s780, 16
        $region93: #{tpu_custom_call.1} parent=88 // pred_fallthru
          _
      $region89: #{tpu_custom_call.1} parent=5 // pred_fallthru
        _
    $region6: #{tpu_custom_call.1} parent=1 // loop_footer
      %s20 = sadd.s32 1, %s16
    $region7: #{tpu_custom_call.1} parent=1 // loop_footer_branch
      %15 = sbr.rel target = $region3
    $region8: #{tpu_custom_call.1} parent=1 // loop_exit
      _
    %784 = vsyncpa [#allocation3], 1
    %s785 = scalar_lea.sflag [#allocation3], 1
    %786 = vsyncpa %s785, 1
    %787 = vsyncpa [#allocation4], 1
    %s788 = scalar_lea.sflag [#allocation4], 1
    %789 = vsyncpa %s788, 1

</llo_original>
